<compile_context>
chip_gen: v6e
topology: v6e:2x2x1
jax: 0.10.0
libtpu: 0.0.40
codegen_flags: <defaults>
</compile_context>

<pallas_src>
import functools

import jax
import jax.numpy as jnp
from jax.experimental import pallas as pl
from jax.experimental.pallas import tpu as pltpu


NEG_SLOPE = 0.2        # nn.LeakyReLU(0.2)
LANE = 128
TILE_B_DEFAULT = 256   # per-step x / out tiles stay ~128 KiB << scoped VMEM


def _leaky_relu(x):
    return jnp.where(x > 0, x, NEG_SLOPE * x)


def _round_up(n, m):
    return ((n + m - 1) // m) * m


def _pad2(a, rows, cols):
    return jnp.pad(a, ((0, rows - a.shape[0]), (0, cols - a.shape[1])))


def encoder_kernel(x_ref, w1_ref, b1_ref, w2_ref, b2_ref, wh_ref, bh_ref,
                   out_ref, *, mm_dtype):
    # Layer 1: h1 = LeakyReLU(x @ W1 + b1)   (MXU in mm_dtype, fp32 accumulate)
    x = x_ref[...].astype(mm_dtype)
    h1 = jnp.dot(x, w1_ref[...], preferred_element_type=jnp.float32) + b1_ref[...]
    h1 = _leaky_relu(h1)

    # Layer 2: h2 = LeakyReLU(h1 @ W2 + b2)
    h2 = jnp.dot(h1.astype(mm_dtype), w2_ref[...],
                 preferred_element_type=jnp.float32) + b2_ref[...]
    h2 = _leaky_relu(h2)

    # Fused heads: [mean | log_var] = h2 @ [Wm | Wv] + [bm | bv]
    out = jnp.dot(h2.astype(mm_dtype), wh_ref[...],
                  preferred_element_type=jnp.float32) + bh_ref[...]
    out_ref[...] = out.astype(out_ref.dtype)


@functools.partial(jax.jit, static_argnames=("tile_b", "use_bf16"))
def encoder_forward(x, params, *, tile_b=TILE_B_DEFAULT, use_bf16=True):
    """x: [B, input_dim] float32. params: weights (in,out) f32, biases (1,out) f32."""
    B, Din = x.shape
    Dh = params["w1"].shape[1]
    Dl = params["wm"].shape[1]

    mm_dtype = jnp.bfloat16 if use_bf16 else jnp.float32

    # Lane-pad feature dims to multiples of 128; zero padding is inert.
    Din_p = _round_up(Din, LANE)
    Dh_p = _round_up(Dh, LANE)
    Dl2_p = _round_up(2 * Dl, LANE)

    # Batch tile: multiple of 8 sublanes, capped at tile_b.
    tb = min(tile_b, _round_up(B, 8))
    B_p = _round_up(B, tb)

    # Pre-cast the activation input to the matmul dtype in the wrapper:
    # halves the x HBM->VMEM DMA bytes on the bf16 path.
    x_p = _pad2(x, B_p, Din_p).astype(mm_dtype)
    w1 = _pad2(params["w1"], Din_p, Dh_p).astype(mm_dtype)
    b1 = _pad2(params["b1"], 1, Dh_p)
    w2 = _pad2(params["w2"], Dh_p, Dh_p).astype(mm_dtype)
    b2 = _pad2(params["b2"], 1, Dh_p)
    w_head = _pad2(jnp.concatenate([params["wm"], params["wv"]], axis=1),
                   Dh_p, Dl2_p).astype(mm_dtype)
    b_head = _pad2(jnp.concatenate([params["bm"], params["bv"]], axis=1), 1, Dl2_p)

    grid = (B_p // tb,)

    def batch_spec(cols):
        return pl.BlockSpec((tb, cols), lambda i: (i, 0))

    def resident(arr):
        # Constant index_map -> block index never changes -> stays resident
        # in VMEM across grid steps (no repeated weight DMA).
        return pl.BlockSpec(arr.shape, lambda i: (0, 0))

    out = pl.pallas_call(
        functools.partial(encoder_kernel, mm_dtype=mm_dtype),
        out_shape=jax.ShapeDtypeStruct((B_p, Dl2_p), jnp.float32),
        grid=grid,
        in_specs=[
            batch_spec(Din_p),
            resident(w1), resident(b1),
            resident(w2), resident(b2),
            resident(w_head), resident(b_head),
        ],
        out_specs=batch_spec(Dl2_p),
        compiler_params=pltpu.CompilerParams(
            dimension_semantics=("parallel",),
        ),
    )(x_p, w1, b1, w2, b2, w_head, b_head)

    mean = out[:B, :Dl]
    log_var = out[:B, Dl:2 * Dl]
    return mean, log_var


def init_params(key, input_dim, hidden_dim, latent_dim):
    """Deterministic synthetic init (torch Linear shapes, stored transposed)."""
    ks = jax.random.split(key, 8)

    def linear(kw, kb, fan_in, fan_out):
        bound = 1.0 / jnp.sqrt(fan_in)
        w = jax.random.uniform(kw, (fan_in, fan_out), jnp.float32, -bound, bound)
        b = jax.random.uniform(kb, (1, fan_out), jnp.float32, -bound, bound)
        return w, b

    w1, b1 = linear(ks[0], ks[1], input_dim, hidden_dim)
    w2, b2 = linear(ks[2], ks[3], hidden_dim, hidden_dim)
    wm, bm = linear(ks[4], ks[5], hidden_dim, latent_dim)
    wv, bv = linear(ks[6], ks[7], hidden_dim, latent_dim)
    return dict(w1=w1, b1=b1, w2=w2, b2=b2, wm=wm, bm=bm, wv=wv, bv=bv)


def encoder_ref(x, p):
    """Pure-JAX fp32 reference identical to the PyTorch forward."""
    h1 = _leaky_relu(x @ p["w1"] + p["b1"])
    h2 = _leaky_relu(h1 @ p["w2"] + p["b2"])
    mean = h2 @ p["wm"] + p["bm"]
    log_var = h2 @ p["wv"] + p["bv"]
    return mean, log_var


def encoder_ref_matched(x, p, mm_dtype):
    """Reference with the same bf16-operand / fp32-accumulate matmul math."""
    def mm(a, w):
        return jnp.dot(a.astype(mm_dtype), w.astype(mm_dtype),
                       preferred_element_type=jnp.float32)
    h1 = _leaky_relu(mm(x, p["w1"]) + p["b1"])
    h2 = _leaky_relu(mm(h1, p["w2"]) + p["b2"])
    mean = mm(h2, p["wm"]) + p["bm"]
    log_var = mm(h2, p["wv"]) + p["bv"]
    return mean, log_var


if __name__ == "__main__":
    key = jax.random.PRNGKey(0)
    k_x, k_p = jax.random.split(key)

    B, input_dim, hidden_dim, latent_dim = 8, 32, 64, 16
    x = jax.random.normal(k_x, (B, input_dim), jnp.float32)
    params = init_params(k_p, input_dim, hidden_dim, latent_dim)

    # 1) Exact fp32 path (torch-identical numerics).
    mean32, logvar32 = encoder_forward(x, params, use_bf16=False)
    jax.block_until_ready((mean32, logvar32))
    mref, vref = encoder_ref(x, params)
    assert jnp.allclose(mean32, mref, atol=1e-5, rtol=1e-5)
    assert jnp.allclose(logvar32, vref, atol=1e-5, rtol=1e-5)

    # 2) bf16-MXU fast path (fp32 accumulation, fp32 elementwise).
    mean_bf, logvar_bf = encoder_forward(x, params, use_bf16=True)
    jax.block_until_ready((mean_bf, logvar_bf))
    m_match, v_match = encoder_ref_matched(x, params, jnp.bfloat16)
    assert jnp.allclose(mean_bf, m_match, atol=1e-4, rtol=1e-4)
    assert jnp.allclose(logvar_bf, v_match, atol=1e-4, rtol=1e-4)
    # Loose sanity check against the exact fp32 semantics as well.
    assert jnp.allclose(mean_bf, mref, atol=3e-2, rtol=3e-2)
    assert jnp.allclose(logvar_bf, vref, atol=3e-2, rtol=3e-2)

    print("KERNEL_OK")
</pallas_src>

<mosaic_0001>
module attributes {stable_mosaic.version = 11 : i64} {
  func.func @encoder_kernel(%arg0: i32, %arg1: memref<8x128xf32, #tpu.memory_space<vmem>>, %arg2: memref<128x128xf32, #tpu.memory_space<vmem>>, %arg3: memref<1x128xf32, #tpu.memory_space<vmem>>, %arg4: memref<128x128xf32, #tpu.memory_space<vmem>>, %arg5: memref<1x128xf32, #tpu.memory_space<vmem>>, %arg6: memref<128x128xf32, #tpu.memory_space<vmem>>, %arg7: memref<1x128xf32, #tpu.memory_space<vmem>>, %arg8: memref<8x128xf32, #tpu.memory_space<vmem>>) attributes {dimension_semantics = [#tpu.dimension_semantics<parallel>], iteration_bounds = array<i64: 1>, scalar_prefetch = 0 : i64, scratch_operands = 0 : i64, tpu.core_type = #tpu.core_type<tc>, window_params = [{transform_indices = @transform_0, window_bounds = array<i64: 8, 128>}, {pipeline_mode = #tpu.pipeline_mode<synchronous>, transform_indices = @transform_1, window_bounds = array<i64: 128, 128>}, {pipeline_mode = #tpu.pipeline_mode<synchronous>, transform_indices = @transform_2, window_bounds = array<i64: 1, 128>}, {pipeline_mode = #tpu.pipeline_mode<synchronous>, transform_indices = @transform_3, window_bounds = array<i64: 128, 128>}, {pipeline_mode = #tpu.pipeline_mode<synchronous>, transform_indices = @transform_4, window_bounds = array<i64: 1, 128>}, {pipeline_mode = #tpu.pipeline_mode<synchronous>, transform_indices = @transform_5, window_bounds = array<i64: 128, 128>}, {pipeline_mode = #tpu.pipeline_mode<synchronous>, transform_indices = @transform_6, window_bounds = array<i64: 1, 128>}, {transform_indices = @transform_7, window_bounds = array<i64: 8, 128>}]} {
    %c0 = arith.constant 0 : index
    %c0_0 = arith.constant 0 : index
    %0 = vector.load %arg1[%c0, %c0_0] : memref<8x128xf32, #tpu.memory_space<vmem>>, vector<8x128xf32>
    %c0_1 = arith.constant 0 : index
    %c0_2 = arith.constant 0 : index
    %1 = vector.load %arg2[%c0_1, %c0_2] : memref<128x128xf32, #tpu.memory_space<vmem>>, vector<128x128xf32>
    %cst = arith.constant dense<0.000000e+00> : vector<8x128xf32>
    %2 = tpu.matmul %0, %1, %cst {dimension_numbers = #tpu.dot_dimension_numbers<[1], [0], [0], [1], [0, 0, 1, 1], [], []>} : vector<8x128xf32>, vector<128x128xf32>, vector<8x128xf32> -> vector<8x128xf32>
    %c0_3 = arith.constant 0 : index
    %c0_4 = arith.constant 0 : index
    %3 = vector.load %arg3[%c0_3, %c0_4] : memref<1x128xf32, #tpu.memory_space<vmem>>, vector<1x128xf32>
    %4 = vector.broadcast %3 : vector<1x128xf32> to vector<8x128xf32>
    %5 = arith.addf %2, %4 : vector<8x128xf32>
    %cst_5 = arith.constant 0.000000e+00 : f32
    %6 = vector.broadcast %cst_5 : f32 to vector<8x128xf32>
    %7 = arith.cmpf ogt, %5, %6 : vector<8x128xf32>
    %cst_6 = arith.constant 2.000000e-01 : f32
    %8 = vector.broadcast %cst_6 : f32 to vector<8x128xf32>
    %9 = arith.mulf %8, %5 : vector<8x128xf32>
    %10 = arith.select %7, %5, %9 : vector<8x128xi1>, vector<8x128xf32>
    %c0_7 = arith.constant 0 : index
    %c0_8 = arith.constant 0 : index
    %11 = vector.load %arg4[%c0_7, %c0_8] : memref<128x128xf32, #tpu.memory_space<vmem>>, vector<128x128xf32>
    %cst_9 = arith.constant dense<0.000000e+00> : vector<8x128xf32>
    %12 = tpu.matmul %10, %11, %cst_9 {dimension_numbers = #tpu.dot_dimension_numbers<[1], [0], [0], [1], [0, 0, 1, 1], [], []>} : vector<8x128xf32>, vector<128x128xf32>, vector<8x128xf32> -> vector<8x128xf32>
    %c0_10 = arith.constant 0 : index
    %c0_11 = arith.constant 0 : index
    %13 = vector.load %arg5[%c0_10, %c0_11] : memref<1x128xf32, #tpu.memory_space<vmem>>, vector<1x128xf32>
    %14 = vector.broadcast %13 : vector<1x128xf32> to vector<8x128xf32>
    %15 = arith.addf %12, %14 : vector<8x128xf32>
    %cst_12 = arith.constant 0.000000e+00 : f32
    %16 = vector.broadcast %cst_12 : f32 to vector<8x128xf32>
    %17 = arith.cmpf ogt, %15, %16 : vector<8x128xf32>
    %cst_13 = arith.constant 2.000000e-01 : f32
    %18 = vector.broadcast %cst_13 : f32 to vector<8x128xf32>
    %19 = arith.mulf %18, %15 : vector<8x128xf32>
    %20 = arith.select %17, %15, %19 : vector<8x128xi1>, vector<8x128xf32>
    %c0_14 = arith.constant 0 : index
    %c0_15 = arith.constant 0 : index
    %21 = vector.load %arg6[%c0_14, %c0_15] : memref<128x128xf32, #tpu.memory_space<vmem>>, vector<128x128xf32>
    %cst_16 = arith.constant dense<0.000000e+00> : vector<8x128xf32>
    %22 = tpu.matmul %20, %21, %cst_16 {dimension_numbers = #tpu.dot_dimension_numbers<[1], [0], [0], [1], [0, 0, 1, 1], [], []>} : vector<8x128xf32>, vector<128x128xf32>, vector<8x128xf32> -> vector<8x128xf32>
    %c0_17 = arith.constant 0 : index
    %c0_18 = arith.constant 0 : index
    %23 = vector.load %arg7[%c0_17, %c0_18] : memref<1x128xf32, #tpu.memory_space<vmem>>, vector<1x128xf32>
    %24 = vector.broadcast %23 : vector<1x128xf32> to vector<8x128xf32>
    %25 = arith.addf %22, %24 : vector<8x128xf32>
    %c0_19 = arith.constant 0 : index
    %c0_20 = arith.constant 0 : index
    %26 = vector.load %arg8[%c0_19, %c0_20] : memref<8x128xf32, #tpu.memory_space<vmem>>, vector<8x128xf32>
    tpu.vector_store %arg8[%c0_19, %c0_20], %25 {strides = array<i32>} : memref<8x128xf32, #tpu.memory_space<vmem>>, vector<8x128xf32>,
    return
  }
  func.func @transform_0(%arg0: i32) -> (i32, i32) {
    %c0_i32 = arith.constant 0 : i32
    %c0_i32_0 = arith.constant 0 : i32
    return %arg0, %c0_i32 : i32, i32
  }
  func.func @transform_1(%arg0: i32) -> (i32, i32) {
    %c0_i32 = arith.constant 0 : i32
    %c0_i32_0 = arith.constant 0 : i32
    %c0_i32_1 = arith.constant 0 : i32
    return %c0_i32, %c0_i32_0 : i32, i32
  }
  func.func @transform_2(%arg0: i32) -> (i32, i32) {
    %c0_i32 = arith.constant 0 : i32
    %c0_i32_0 = arith.constant 0 : i32
    %c0_i32_1 = arith.constant 0 : i32
    return %c0_i32, %c0_i32_0 : i32, i32
  }
  func.func @transform_3(%arg0: i32) -> (i32, i32) {
    %c0_i32 = arith.constant 0 : i32
    %c0_i32_0 = arith.constant 0 : i32
    %c0_i32_1 = arith.constant 0 : i32
    return %c0_i32, %c0_i32_0 : i32, i32
  }
  func.func @transform_4(%arg0: i32) -> (i32, i32) {
    %c0_i32 = arith.constant 0 : i32
    %c0_i32_0 = arith.constant 0 : i32
    %c0_i32_1 = arith.constant 0 : i32
    return %c0_i32, %c0_i32_0 : i32, i32
  }
  func.func @transform_5(%arg0: i32) -> (i32, i32) {
    %c0_i32 = arith.constant 0 : i32
    %c0_i32_0 = arith.constant 0 : i32
    %c0_i32_1 = arith.constant 0 : i32
    return %c0_i32, %c0_i32_0 : i32, i32
  }
  func.func @transform_6(%arg0: i32) -> (i32, i32) {
    %c0_i32 = arith.constant 0 : i32
    %c0_i32_0 = arith.constant 0 : i32
    %c0_i32_1 = arith.constant 0 : i32
    return %c0_i32, %c0_i32_0 : i32, i32
  }
  func.func @transform_7(%arg0: i32) -> (i32, i32) {
    %c0_i32 = arith.constant 0 : i32
    %c0_i32_0 = arith.constant 0 : i32
    return %arg0, %c0_i32 : i32, i32
  }
}

</mosaic_0001>

<llo_original>
// kernel: encoder_forward.1
$region0: #{encoder_forward.1}
  #allocation0 [shape = 'u32[]', space=smem, size = 0x4, offset = 0x4, fixed_abs, tag = 'smem constant byte address 0x4 - core index']
  #allocation1 [shape = 'u32[144,128]{1,0:T(1,128)}', space=vmem, size = 0x12000, scoped, tag = 'internal scratch']
  %s0 = inlined_call_operand.vmem [shape: f32[8,128], index: 0, kind: input, shape index: {}]
  %s1 = inlined_call_operand.vmem [shape: f32[128,128], index: 1, kind: input, shape index: {}]
  %s2 = inlined_call_operand.vmem [shape: f32[1,128], index: 2, kind: input, shape index: {}]
  %s3 = inlined_call_operand.vmem [shape: f32[128,128], index: 3, kind: input, shape index: {}]
  %s4 = inlined_call_operand.vmem [shape: f32[1,128], index: 4, kind: input, shape index: {}]
  %s5 = inlined_call_operand.vmem [shape: f32[128,128], index: 5, kind: input, shape index: {}]
  %s6 = inlined_call_operand.vmem [shape: f32[1,128], index: 6, kind: input, shape index: {}]
  %s7 = inlined_call_operand.vmem [shape: f32[8,128], index: 7, kind: output, shape index: {}]
  %s8 = sld [smem:[#allocation0]]
  $region38: #{encoder_forward.1} parent=0
    _
  %s10 = ssub.s32 1, %s8
  %s11 = scalar_select 0, %s10, %s8
  // Predicated region
  $region2: #{encoder_forward.1} parent=0 // pred_check
    _
  $region3: #{encoder_forward.1} parent=0 // pred_check_branch
    %13 = sbr.rel (0) target = $region5
  $region4: #{encoder_forward.1} parent=0 // pred_region
    _
  $region5: #{encoder_forward.1} parent=0 // pred_fallthru
    _
  // Predicated region
  $region6: #{encoder_forward.1} parent=0 // pred_check
    _
  $region7: #{encoder_forward.1} parent=0 // pred_check_branch
    %15 = sbr.rel (0) target = $region9
  $region8: #{encoder_forward.1} parent=0 // pred_region
    _
  $region9: #{encoder_forward.1} parent=0 // pred_fallthru
    _
  // Predicated region
  $region10: #{encoder_forward.1} parent=0 // pred_check
    _
  $region11: #{encoder_forward.1} parent=0 // pred_check_branch
    %17 = sbr.rel (0) target = $region13
  $region12: #{encoder_forward.1} parent=0 // pred_region
    _
  $region13: #{encoder_forward.1} parent=0 // pred_fallthru
    _
  // Predicated region
  $region14: #{encoder_forward.1} parent=0 // pred_check
    _
  $region15: #{encoder_forward.1} parent=0 // pred_check_branch
    %19 = sbr.rel (0) target = $region17
  $region16: #{encoder_forward.1} parent=0 // pred_region
    _
  $region17: #{encoder_forward.1} parent=0 // pred_fallthru
    _
  // Predicated region
  $region18: #{encoder_forward.1} parent=0 // pred_check
    _
  $region19: #{encoder_forward.1} parent=0 // pred_check_branch
    %21 = sbr.rel (0) target = $region21
  $region20: #{encoder_forward.1} parent=0 // pred_region
    _
  $region21: #{encoder_forward.1} parent=0 // pred_fallthru
    _
  // Predicated region
  $region22: #{encoder_forward.1} parent=0 // pred_check
    _
  $region23: #{encoder_forward.1} parent=0 // pred_check_branch
    %23 = sbr.rel (0) target = $region25
  $region24: #{encoder_forward.1} parent=0 // pred_region
    _
  $region25: #{encoder_forward.1} parent=0 // pred_fallthru
    _
  // Predicated region
  $region26: #{encoder_forward.1} parent=0 // pred_check
    _
  $region27: #{encoder_forward.1} parent=0 // pred_check_branch
    %25 = sbr.rel (0) target = $region29
  $region28: #{encoder_forward.1} parent=0 // pred_region
    _
  $region29: #{encoder_forward.1} parent=0 // pred_fallthru
    _
  %v26 = vld [vmem:[%s0] sm:$0xff]
  %v27 = vld [vmem:[%s1] sm:$0xff]
  %v28 = vld [vmem:[%s1 + $0x8] sm:$0xff]
  %v29 = vld [vmem:[%s1 + $0x10] sm:$0xff]
  %v30 = vld [vmem:[%s1 + $0x18] sm:$0xff]
  %v31 = vld [vmem:[%s1 + $0x20] sm:$0xff]
  %v32 = vld [vmem:[%s1 + $0x28] sm:$0xff]
  %v33 = vld [vmem:[%s1 + $0x30] sm:$0xff]
  %v34 = vld [vmem:[%s1 + $0x38] sm:$0xff]
  %v35 = vld [vmem:[%s1 + $0x40] sm:$0xff]
  %v36 = vld [vmem:[%s1 + $0x48] sm:$0xff]
  %v37 = vld [vmem:[%s1 + $0x50] sm:$0xff]
  %v38 = vld [vmem:[%s1 + $0x58] sm:$0xff]
  %v39 = vld [vmem:[%s1 + $0x60] sm:$0xff]
  %v40 = vld [vmem:[%s1 + $0x68] sm:$0xff]
  %v41 = vld [vmem:[%s1 + $0x70] sm:$0xff]
  %v42 = vld [vmem:[%s1 + $0x78] sm:$0xff]
  %v43 = vld [vmem:[%s2] sm:$0x1]
  %v45 = vlaneseq
  %v46 = vshrl.u32 %v45, 7
  %v47 = vsub.s32 0, %v46
  %v48 = vrot.slane %v43, %v47
  %50 = vmatprep.subr.mxu0 0.0
  %51 = vmatpush1.msra.mxu0 %v42
  %52 = vmatprep.subr.mxu0 0.0
  %53 = vmatpush1.msra.mxu0 %v41
  %54 = vmatprep.subr.mxu0 0.0
  %55 = vmatpush1.msra.mxu0 %v40
  %56 = vmatprep.subr.mxu0 0.0
  %57 = vmatpush1.msra.mxu0 %v39
  %58 = vmatprep.subr.mxu0 0.0
  %59 = vmatpush1.msra.mxu0 %v38
  %60 = vmatprep.subr.mxu0 0.0
  %61 = vmatpush1.msra.mxu0 %v37
  %62 = vmatprep.subr.mxu0 0.0
  %63 = vmatpush1.msra.mxu0 %v36
  %64 = vmatprep.subr.mxu0 0.0
  %65 = vmatpush1.msra.mxu0 %v35
  %66 = vmatprep.subr.mxu0 0.0
  %67 = vmatpush1.msra.mxu0 %v34
  %68 = vmatprep.subr.mxu0 0.0
  %69 = vmatpush1.msra.mxu0 %v33
  %70 = vmatprep.subr.mxu0 0.0
  %71 = vmatpush1.msra.mxu0 %v32
  %72 = vmatprep.subr.mxu0 0.0
  %73 = vmatpush1.msra.mxu0 %v31
  %74 = vmatprep.subr.mxu0 0.0
  %75 = vmatpush1.msra.mxu0 %v30
  %76 = vmatprep.subr.mxu0 0.0
  %77 = vmatpush1.msra.mxu0 %v29
  %78 = vmatprep.subr.mxu0 0.0
  %79 = vmatpush1.msra.mxu0 %v28
  %80 = vmatprep.subr.mxu0 0.0
  %81 = vmatpush1.msra.mxu0 %v27
  %82 = vmatprep.subr.mxu0 0.0
  %83 = vmatpush2.msra.mxu0 0.0
  %84 = vmatprep.subr.mxu0 0.0
  %85 = vmatpush2.msra.mxu0 0.0
  %86 = vmatprep.subr.mxu0 0.0
  %87 = vmatpush2.msra.mxu0 0.0
  %88 = vmatprep.subr.mxu0 0.0
  %89 = vmatpush2.msra.mxu0 0.0
  %90 = vmatprep.subr.mxu0 0.0
  %91 = vmatpush2.msra.mxu0 0.0
  %92 = vmatprep.subr.mxu0 0.0
  %93 = vmatpush2.msra.mxu0 0.0
  %94 = vmatprep.subr.mxu0 0.0
  %95 = vmatpush2.msra.mxu0 0.0
  %96 = vmatprep.subr.mxu0 0.0
  %97 = vmatpush2.msra.mxu0 0.0
  %98 = vmatprep.subr.mxu0 0.0
  %99 = vmatpush2.msra.mxu0 0.0
  %100 = vmatprep.subr.mxu0 0.0
  %101 = vmatpush2.msra.mxu0 0.0
  %102 = vmatprep.subr.mxu0 0.0
  %103 = vmatpush2.msra.mxu0 0.0
  %104 = vmatprep.subr.mxu0 0.0
  %105 = vmatpush2.msra.mxu0 0.0
  %106 = vmatprep.subr.mxu0 0.0
  %107 = vmatpush2.msra.mxu0 0.0
  %108 = vmatprep.subr.mxu0 0.0
  %109 = vmatpush2.msra.mxu0 0.0
  %110 = vmatprep.subr.mxu0 0.0
  %111 = vmatpush2.msra.mxu0 0.0
  %112 = vmatprep.subr.mxu0 0.0
  %113 = vmatpush2.msra.mxu0 0.0
  %114 = vmatprep.mubr.f32.mxu0 0.0
  %115 = vmatmul.mubr.f32.gmra.mxu0 %v26
  %v116 = vpop.f32.mrf.mxu0
  %v117 = vadd.f32 %v48, %v116
  %v118 = vpop.f32.mrf.mxu0
  %119 = vdwg.mxu0
  %vm120 = vcmp.gt.f32.partialorder %v117, 0.0
  %v121 = vmul.f32 %v117, 0.2
  %v122 = vsel %vm120, %v117, %v121
  %v123 = vld [vmem:[%s3] sm:$0xff]
  %v124 = vld [vmem:[%s3 + $0x8] sm:$0xff]
  %v125 = vld [vmem:[%s3 + $0x10] sm:$0xff]
  %v126 = vld [vmem:[%s3 + $0x18] sm:$0xff]
  %v127 = vld [vmem:[%s3 + $0x20] sm:$0xff]
  %v128 = vld [vmem:[%s3 + $0x28] sm:$0xff]
  %v129 = vld [vmem:[%s3 + $0x30] sm:$0xff]
  %v130 = vld [vmem:[%s3 + $0x38] sm:$0xff]
  %v131 = vld [vmem:[%s3 + $0x40] sm:$0xff]
  %v132 = vld [vmem:[%s3 + $0x48] sm:$0xff]
  %v133 = vld [vmem:[%s3 + $0x50] sm:$0xff]
  %v134 = vld [vmem:[%s3 + $0x58] sm:$0xff]
  %v135 = vld [vmem:[%s3 + $0x60] sm:$0xff]
  %v136 = vld [vmem:[%s3 + $0x68] sm:$0xff]
  %v137 = vld [vmem:[%s3 + $0x70] sm:$0xff]
  %v138 = vld [vmem:[%s3 + $0x78] sm:$0xff]
  %v139 = vld [vmem:[%s4] sm:$0x1]
  %v141 = vlaneseq
  %v142 = vshrl.u32 %v141, 7
  %v143 = vsub.s32 0, %v142
  %v144 = vrot.slane %v139, %v143
  %146 = vmatprep.subr.mxu0 0.0
  %147 = vmatpush1.msra.mxu0 %v138
  %148 = vmatprep.subr.mxu0 0.0
  %149 = vmatpush1.msra.mxu0 %v137
  %150 = vmatprep.subr.mxu0 0.0
  %151 = vmatpush1.msra.mxu0 %v136
  %152 = vmatprep.subr.mxu0 0.0
  %153 = vmatpush1.msra.mxu0 %v135
  %154 = vmatprep.subr.mxu0 0.0
  %155 = vmatpush1.msra.mxu0 %v134
  %156 = vmatprep.subr.mxu0 0.0
  %157 = vmatpush1.msra.mxu0 %v133
  %158 = vmatprep.subr.mxu0 0.0
  %159 = vmatpush1.msra.mxu0 %v132
  %160 = vmatprep.subr.mxu0 0.0
  %161 = vmatpush1.msra.mxu0 %v131
  %162 = vmatprep.subr.mxu0 0.0
  %163 = vmatpush1.msra.mxu0 %v130
  %164 = vmatprep.subr.mxu0 0.0
  %165 = vmatpush1.msra.mxu0 %v129
  %166 = vmatprep.subr.mxu0 0.0
  %167 = vmatpush1.msra.mxu0 %v128
  %168 = vmatprep.subr.mxu0 0.0
  %169 = vmatpush1.msra.mxu0 %v127
  %170 = vmatprep.subr.mxu0 0.0
  %171 = vmatpush1.msra.mxu0 %v126
  %172 = vmatprep.subr.mxu0 0.0
  %173 = vmatpush1.msra.mxu0 %v125
  %174 = vmatprep.subr.mxu0 0.0
  %175 = vmatpush1.msra.mxu0 %v124
  %176 = vmatprep.subr.mxu0 0.0
  %177 = vmatpush1.msra.mxu0 %v123
  %178 = vmatprep.subr.mxu0 0.0
  %179 = vmatpush2.msra.mxu0 0.0
  %180 = vmatprep.subr.mxu0 0.0
  %181 = vmatpush2.msra.mxu0 0.0
  %182 = vmatprep.subr.mxu0 0.0
  %183 = vmatpush2.msra.mxu0 0.0
  %184 = vmatprep.subr.mxu0 0.0
  %185 = vmatpush2.msra.mxu0 0.0
  %186 = vmatprep.subr.mxu0 0.0
  %187 = vmatpush2.msra.mxu0 0.0
  %188 = vmatprep.subr.mxu0 0.0
  %189 = vmatpush2.msra.mxu0 0.0
  %190 = vmatprep.subr.mxu0 0.0
  %191 = vmatpush2.msra.mxu0 0.0
  %192 = vmatprep.subr.mxu0 0.0
  %193 = vmatpush2.msra.mxu0 0.0
  %194 = vmatprep.subr.mxu0 0.0
  %195 = vmatpush2.msra.mxu0 0.0
  %196 = vmatprep.subr.mxu0 0.0
  %197 = vmatpush2.msra.mxu0 0.0
  %198 = vmatprep.subr.mxu0 0.0
  %199 = vmatpush2.msra.mxu0 0.0
  %200 = vmatprep.subr.mxu0 0.0
  %201 = vmatpush2.msra.mxu0 0.0
  %202 = vmatprep.subr.mxu0 0.0
  %203 = vmatpush2.msra.mxu0 0.0
  %204 = vmatprep.subr.mxu0 0.0
  %205 = vmatpush2.msra.mxu0 0.0
  %206 = vmatprep.subr.mxu0 0.0
  %207 = vmatpush2.msra.mxu0 0.0
  %208 = vmatprep.subr.mxu0 0.0
  %209 = vmatpush2.msra.mxu0 0.0
  %210 = vmatprep.mubr.f32.mxu0 0.0
  %211 = vmatmul.mubr.f32.gmra.mxu0 %v122
  %v212 = vpop.f32.mrf.mxu0
  %v213 = vadd.f32 %v144, %v212
  %v214 = vpop.f32.mrf.mxu0
  %215 = vdwg.mxu0
  %vm216 = vcmp.gt.f32.partialorder %v213, 0.0
  %v217 = vmul.f32 %v213, 0.2
  %v218 = vsel %vm216, %v213, %v217
  %v219 = vld [vmem:[%s5] sm:$0xff]
  %v220 = vld [vmem:[%s5 + $0x8] sm:$0xff]
  %v221 = vld [vmem:[%s5 + $0x10] sm:$0xff]
  %v222 = vld [vmem:[%s5 + $0x18] sm:$0xff]
  %v223 = vld [vmem:[%s5 + $0x20] sm:$0xff]
  %v224 = vld [vmem:[%s5 + $0x28] sm:$0xff]
  %v225 = vld [vmem:[%s5 + $0x30] sm:$0xff]
  %v226 = vld [vmem:[%s5 + $0x38] sm:$0xff]
  %v227 = vld [vmem:[%s5 + $0x40] sm:$0xff]
  %v228 = vld [vmem:[%s5 + $0x48] sm:$0xff]
  %v229 = vld [vmem:[%s5 + $0x50] sm:$0xff]
  %v230 = vld [vmem:[%s5 + $0x58] sm:$0xff]
  %v231 = vld [vmem:[%s5 + $0x60] sm:$0xff]
  %v232 = vld [vmem:[%s5 + $0x68] sm:$0xff]
  %v233 = vld [vmem:[%s5 + $0x70] sm:$0xff]
  %v234 = vld [vmem:[%s5 + $0x78] sm:$0xff]
  %v235 = vld [vmem:[%s6] sm:$0x1]
  %v237 = vlaneseq
  %v238 = vshrl.u32 %v237, 7
  %v239 = vsub.s32 0, %v238
  %v240 = vrot.slane %v235, %v239
  %242 = vmatprep.subr.mxu0 0.0
  %243 = vmatpush1.msra.mxu0 %v234
  %244 = vmatprep.subr.mxu0 0.0
  %245 = vmatpush1.msra.mxu0 %v233
  %246 = vmatprep.subr.mxu0 0.0
  %247 = vmatpush1.msra.mxu0 %v232
  %248 = vmatprep.subr.mxu0 0.0
  %249 = vmatpush1.msra.mxu0 %v231
  %250 = vmatprep.subr.mxu0 0.0
  %251 = vmatpush1.msra.mxu0 %v230
  %252 = vmatprep.subr.mxu0 0.0
  %253 = vmatpush1.msra.mxu0 %v229
  %254 = vmatprep.subr.mxu0 0.0
  %255 = vmatpush1.msra.mxu0 %v228
  %256 = vmatprep.subr.mxu0 0.0
  %257 = vmatpush1.msra.mxu0 %v227
  %258 = vmatprep.subr.mxu0 0.0
  %259 = vmatpush1.msra.mxu0 %v226
  %260 = vmatprep.subr.mxu0 0.0
  %261 = vmatpush1.msra.mxu0 %v225
  %262 = vmatprep.subr.mxu0 0.0
  %263 = vmatpush1.msra.mxu0 %v224
  %264 = vmatprep.subr.mxu0 0.0
  %265 = vmatpush1.msra.mxu0 %v223
  %266 = vmatprep.subr.mxu0 0.0
  %267 = vmatpush1.msra.mxu0 %v222
  %268 = vmatprep.subr.mxu0 0.0
  %269 = vmatpush1.msra.mxu0 %v221
  %270 = vmatprep.subr.mxu0 0.0
  %271 = vmatpush1.msra.mxu0 %v220
  %272 = vmatprep.subr.mxu0 0.0
  %273 = vmatpush1.msra.mxu0 %v219
  %274 = vmatprep.subr.mxu0 0.0
  %275 = vmatpush2.msra.mxu0 0.0
  %276 = vmatprep.subr.mxu0 0.0
  %277 = vmatpush2.msra.mxu0 0.0
  %278 = vmatprep.subr.mxu0 0.0
  %279 = vmatpush2.msra.mxu0 0.0
  %280 = vmatprep.subr.mxu0 0.0
  %281 = vmatpush2.msra.mxu0 0.0
  %282 = vmatprep.subr.mxu0 0.0
  %283 = vmatpush2.msra.mxu0 0.0
  %284 = vmatprep.subr.mxu0 0.0
  %285 = vmatpush2.msra.mxu0 0.0
  %286 = vmatprep.subr.mxu0 0.0
  %287 = vmatpush2.msra.mxu0 0.0
  %288 = vmatprep.subr.mxu0 0.0
  %289 = vmatpush2.msra.mxu0 0.0
  %290 = vmatprep.subr.mxu0 0.0
  %291 = vmatpush2.msra.mxu0 0.0
  %292 = vmatprep.subr.mxu0 0.0
  %293 = vmatpush2.msra.mxu0 0.0
  %294 = vmatprep.subr.mxu0 0.0
  %295 = vmatpush2.msra.mxu0 0.0
  %296 = vmatprep.subr.mxu0 0.0
  %297 = vmatpush2.msra.mxu0 0.0
  %298 = vmatprep.subr.mxu0 0.0
  %299 = vmatpush2.msra.mxu0 0.0
  %300 = vmatprep.subr.mxu0 0.0
  %301 = vmatpush2.msra.mxu0 0.0
  %302 = vmatprep.subr.mxu0 0.0
  %303 = vmatpush2.msra.mxu0 0.0
  %304 = vmatprep.subr.mxu0 0.0
  %305 = vmatpush2.msra.mxu0 0.0
  %306 = vmatprep.mubr.f32.mxu0 0.0
  %307 = vmatmul.mubr.f32.gmra.mxu0 %v218
  %v308 = vpop.f32.mrf.mxu0
  %v309 = vadd.f32 %v240, %v308
  %v310 = vpop.f32.mrf.mxu0
  %311 = vdwg.mxu0
  %312 = vst [vmem:[%s7] sm:$0xff] %v309
  // Predicated region
  $region30: #{encoder_forward.1} parent=0 // pred_check
    _
  $region31: #{encoder_forward.1} parent=0 // pred_check_branch
    %314 = sbr.rel (0) target = $region33
  $region32: #{encoder_forward.1} parent=0 // pred_region
    _
  $region33: #{encoder_forward.1} parent=0 // pred_fallthru
    _
  // Predicated region
  $region34: #{encoder_forward.1} parent=0 // pred_check
    _
  $region35: #{encoder_forward.1} parent=0 // pred_check_branch
    %316 = sbr.rel (0) target = $region37
  $region36: #{encoder_forward.1} parent=0 // pred_region
    _
  $region37: #{encoder_forward.1} parent=0 // pred_fallthru
    _

</llo_original>
